<compile_context>
chip_gen: v6e
topology: v6e:2x2x1
jax: 0.10.0
libtpu: 0.0.40
codegen_flags: <defaults>
</compile_context>

<pallas_src>
import functools
import math

import jax
import jax.numpy as jnp
from jax.experimental import pallas as pl
from jax.experimental.pallas import tpu as pltpu


def _round_up(x, m):
    return ((x + m - 1) // m) * m


def _use_bf16_gates():
    # v5e has no bf16 VPU/EUP -> keep gate math in f32 there; v6e/v7x run the
    # gate transcendentals (3 sigmoid + 2 tanh per step) in bf16.
    try:
        kind = jax.devices()[0].device_kind.lower()
    except Exception:
        return False
    return "v5" not in kind


# ------------------------- conv matmul(+bias+ReLU) ---------------------------

def _matmul_bias_kernel(a_ref, w_ref, b_ref, o_ref, *, relu):
    acc = jnp.dot(a_ref[...], w_ref[...], preferred_element_type=jnp.float32)
    acc = acc + b_ref[...]
    if relu:
        acc = jnp.maximum(acc, 0.0)
    o_ref[...] = acc.astype(o_ref.dtype)


def matmul_bias(a, w, b, *, relu, tm=512):
    """(relu)(a @ w + b) -> bf16.  a:(M,K), w:(K,N), b:(N,).

    N is zero-padded to a multiple of 128 (lane-dense unmasked stores; padding
    sliced off on return).  bf16 operands/output, f32 accumulation.  Grid tiles
    M (parallel), full K and N resident per tile.
    """
    M, K = a.shape
    K2, N = w.shape
    assert K == K2
    NP = max(128, _round_up(N, 128))
    if NP != N:
        w = jnp.pad(w, ((0, 0), (0, NP - N)))
        b = jnp.pad(b, ((0, NP - N),))

    Mr = _round_up(M, 8)
    tm = min(tm, Mr)
    if Mr > 8 and Mr // tm < 2:      # keep >= 2 grid steps for v7x's 2 TCs
        tm = _round_up((Mr + 1) // 2, 8)
    Mp = _round_up(M, tm)
    if Mp != M:
        a = jnp.pad(a, ((0, Mp - M), (0, 0)))

    a_bf = a.astype(jnp.bfloat16)
    w_bf = w.astype(jnp.bfloat16)
    b2 = b.reshape(1, NP).astype(jnp.float32)

    out = pl.pallas_call(
        functools.partial(_matmul_bias_kernel, relu=relu),
        out_shape=jax.ShapeDtypeStruct((Mp, NP), jnp.bfloat16),
        grid_spec=pltpu.PrefetchScalarGridSpec(
            num_scalar_prefetch=0,
            grid=(Mp // tm,),
            in_specs=[pl.BlockSpec((tm, K), lambda i: (i, 0)),
                      pl.BlockSpec((K, NP), lambda i: (0, 0)),
                      pl.BlockSpec((1, NP), lambda i: (0, 0))],
            out_specs=pl.BlockSpec((tm, NP), lambda i: (i, 0))),
        compiler_params=pltpu.CompilerParams(
            dimension_semantics=("parallel",)),
    )(a_bf, w_bf, b2)
    return out[:M, :N]


# ----------------- fused conv4 + LSTM recurrence + FC kernel -----------------

def _conv4_lstm_fc_kernel(flat_ref, w4_ref, b4_ref, wih_ref, b_ref,
                          whh_hbm, wfc_hbm, bfc_ref, o_ref,
                          whh_sc, wfc_sc, sem, gx_sc, h_sc,
                          *, T, Bp, H, bf16_gates):
    # flat_ref: (T*Bp, K4) bf16 time-major conv4 patches. w4_ref: (K4, H) bf16.
    # wih_ref: (H, 4H) bf16. whh_hbm/wfc_hbm: HBM refs (copied into scratch).
    # b_ref: (1, 4H) f32. bfc_ref: (1, NP) f32. o_ref: (T*Bp, NP) f32.

    # Overlap the W_hh / W_fc weight DMAs (only needed after the two hoisted
    # matmuls) with the conv4 + input-projection compute.
    whh_cp = pltpu.make_async_copy(whh_hbm, whh_sc, sem.at[0])
    wfc_cp = pltpu.make_async_copy(wfc_hbm, wfc_sc, sem.at[1])
    whh_cp.start()
    wfc_cp.start()

    # Fused conv4: 7x7 kernel over a 7x7 map == one matmul (+bias+ReLU).
    feat = jnp.dot(flat_ref[...], w4_ref[...],
                   preferred_element_type=jnp.float32) + b4_ref[...]
    feat = jnp.maximum(feat, 0.0)

    # Hoisted input projection for all timesteps (single MXU matmul).
    gx_sc[...] = jnp.dot(feat.astype(jnp.bfloat16), wih_ref[...],
                         preferred_element_type=jnp.float32) + b_ref[...]

    whh_cp.wait()

    h = jnp.zeros((Bp, H), jnp.float32)
    c = jnp.zeros((Bp, H), jnp.float32)
    for t in range(T):  # static unrolled serial recurrence; only h@W_hh per step
        gates = gx_sc[t * Bp:(t + 1) * Bp, :] + jnp.dot(
            h.astype(jnp.bfloat16), whh_sc[...],
            preferred_element_type=jnp.float32)
        g = gates.astype(jnp.bfloat16) if bf16_gates else gates
        i_g = jax.nn.sigmoid(g[:, 0:H]).astype(jnp.float32)
        f_g = jax.nn.sigmoid(g[:, H:2 * H]).astype(jnp.float32)
        g_g = jnp.tanh(g[:, 2 * H:3 * H]).astype(jnp.float32)
        o_g = jax.nn.sigmoid(g[:, 3 * H:4 * H]).astype(jnp.float32)
        c = f_g * c + i_g * g_g                       # state math stays f32
        if bf16_gates:
            h = o_g * jnp.tanh(c.astype(jnp.bfloat16)).astype(jnp.float32)
        else:
            h = o_g * jnp.tanh(c)
        # (8,128)-tile-aligned store; replaces the old hs-list + concatenate.
        h_sc[t * Bp:(t + 1) * Bp, :] = h

    wfc_cp.wait()
    # Fused FC over the whole h-sequence -> lane-dense (128-padded) output.
    o_ref[...] = jnp.dot(h_sc[...].astype(jnp.bfloat16), wfc_sc[...],
                         preferred_element_type=jnp.float32) + bfc_ref[...]


def conv4_lstm_fc_forward(flat4, w4_mat, b4, w_ih, w_hh, b_ih, b_hh, w_fc, b_fc,
                          *, batch_size, trainLength, num_cell, num_action,
                          bf16_gates):
    """flat4: (B*T, K4) conv4 im2col patches, row order (b, t).

    Returns (B*T, num_action) f32 in PyTorch row order (batch_first=True).
    """
    B, T, H = batch_size, trainLength, num_cell
    K4 = flat4.shape[1]
    Bp = max(8, _round_up(B, 8))               # sublane-aligned batch
    NP = max(128, _round_up(num_action, 128))  # lane-dense FC output

    # (B*T, K4) (b,t)-major  ->  (T*Bp, K4) time-major, batch padded to Bp.
    x = flat4.reshape(B, T, K4)
    x = jnp.transpose(x, (1, 0, 2))
    x = jnp.pad(x, ((0, 0), (0, Bp - B), (0, 0)))
    x = x.reshape(T * Bp, K4).astype(jnp.bfloat16)

    w4_bf = w4_mat.astype(jnp.bfloat16)                        # (K4, H)
    b4_2 = b4.reshape(1, H).astype(jnp.float32)
    wih_t = jnp.transpose(w_ih).astype(jnp.bfloat16)           # (H, 4H)
    whh_t = jnp.transpose(w_hh).astype(jnp.bfloat16)           # (H, 4H)
    bias = (b_ih + b_hh).reshape(1, 4 * H).astype(jnp.float32)
    wfc_p = jnp.zeros((H, NP), jnp.float32)
    wfc_p = wfc_p.at[:, :num_action].set(jnp.transpose(w_fc)).astype(jnp.bfloat16)
    bfc_p = jnp.zeros((1, NP), jnp.float32).at[:, :num_action].set(
        b_fc.reshape(1, num_action))

    vmem = pl.BlockSpec(memory_space=pltpu.MemorySpace.VMEM)
    hbm = pl.BlockSpec(memory_space=pl.ANY)     # W_hh / W_fc: manual DMA overlap
    out_tb = pl.pallas_call(
        functools.partial(_conv4_lstm_fc_kernel, T=T, Bp=Bp, H=H,
                          bf16_gates=bf16_gates),
        out_shape=jax.ShapeDtypeStruct((T * Bp, NP), jnp.float32),
        in_specs=[vmem, vmem, vmem, vmem, vmem, hbm, hbm, vmem],
        out_specs=vmem,
        scratch_shapes=[pltpu.VMEM((H, 4 * H), jnp.bfloat16),      # W_hh buf
                        pltpu.VMEM((H, NP), jnp.bfloat16),         # W_fc buf
                        pltpu.SemaphoreType.DMA((2,)),
                        pltpu.VMEM((T * Bp, 4 * H), jnp.float32),  # gx (hoisted)
                        pltpu.VMEM((T * Bp, H), jnp.float32)],     # h sequence
    )(x, w4_bf, b4_2, wih_t, bias, whh_t, wfc_p, bfc_p)

    # Rows are (t, b)-major incl. padded batch rows; restore PyTorch (b, t)
    # ordering of rnn_out.view(-1, num_cell) and drop lane/batch padding.
    out = out_tb.reshape(T, Bp, NP)[:, :B, :num_action]
    return jnp.transpose(out, (1, 0, 2)).reshape(B * T, num_action)


# ------------------------------- JAX glue ------------------------------------

def im2col(x, kh, kw, stride):
    """x: (N, H, W, C) NHWC -> patches (N, OH, OW, kh*kw*C), patch order (kh,kw,C)."""
    # TODO(synk): im2col patches are still materialized in HBM between kernels;
    # a fully fused conv kernel (index_map over overlapping windows) would avoid it.
    N, H, W, C = x.shape
    oh = (H - kh) // stride + 1
    ow = (W - kw) // stride + 1
    patches = []
    for i in range(kh):
        for j in range(kw):
            patches.append(x[:, i:i + stride * oh:stride, j:j + stride * ow:stride, :])
    p = jnp.stack(patches, axis=3)              # (N, oh, ow, kh*kw, C)
    return p.reshape(N, oh, ow, kh * kw * C), oh, ow


def lstm_net_forward(x_nchw, params, keep_rate, trainLength, num_cell, batch_size):
    """Forward pass matching the PyTorch module (inference-mode dropout)."""
    x = jnp.transpose(x_nchw, (0, 2, 3, 1))     # NCHW -> NHWC

    # conv1..conv3: im2col + tiled lane-dense Pallas matmul(+bias+ReLU), bf16 acts
    for (w_mat, b, k, s) in params["convs"][:-1]:
        patches, oh, ow = im2col(x, k, k, s)
        n = patches.shape[0]
        flat = patches.reshape(n * oh * ow, -1)
        out = matmul_bias(flat, w_mat, b, relu=True)
        x = out.reshape(n, oh, ow, -1)

    # conv4 (7x7 over the 7x7 conv3 map -> 1x1x512) is fused into the LSTM+FC
    # kernel: its im2col collapses to one (B*T, 3136) row per sample.
    w4_mat, b4, k4, s4 = params["convs"][-1]
    patches, oh, ow = im2col(x, k4, k4, s4)
    assert oh == 1 and ow == 1
    flat4 = patches.reshape(patches.shape[0], -1)

    # TODO(synk): F.dropout(p=1-keep_rate) is identity here (inference / keep_rate=1.0)
    num_action = params["w_fc"].shape[0]
    return conv4_lstm_fc_forward(
        flat4, w4_mat, b4, params["w_ih"], params["w_hh"], params["b_ih"],
        params["b_hh"], params["w_fc"], params["b_fc"],
        batch_size=batch_size, trainLength=trainLength, num_cell=num_cell,
        num_action=num_action, bf16_gates=_use_bf16_gates())


# --------------------------------- main ---------------------------------------

if __name__ == "__main__":
    num_action = 4
    num_cell = 512            # forced by the conv stack: 512 x 1 x 1 features
    batch_size = 2
    trainLength = 4
    keep_rate = 1.0
    N = batch_size * trainLength
    H0 = W0 = 84              # minimal spatial size so conv4 (k=7) reduces to 1x1

    key = jax.random.PRNGKey(0)
    keys = jax.random.split(key, 16)

    def uinit(k, shape, fan_in):
        bound = 1.0 / math.sqrt(fan_in)
        return jax.random.uniform(k, shape, jnp.float32, -bound, bound)

    # Conv layers: (in_ch, out_ch, kernel, stride), PyTorch weight (OC,IC,KH,KW)
    conv_cfg = [(1, 32, 8, 4), (32, 64, 4, 2), (64, 64, 3, 1), (64, 512, 7, 1)]
    convs = []
    ki = 0
    for ic, oc, k, s in conv_cfg:
        fan = ic * k * k
        w = uinit(keys[ki], (oc, ic, k, k), fan); ki += 1
        b = uinit(keys[ki], (oc,), fan); ki += 1
        # (OC,IC,KH,KW) -> (KH,KW,IC,OC) -> (KH*KW*IC, OC) to match im2col order
        w_mat = jnp.transpose(w, (2, 3, 1, 0)).reshape(k * k * ic, oc)
        convs.append((w_mat, b, k, s))

    # LSTM params (PyTorch layout: (4H, in) / (4H, H), gate order i,f,g,o)
    w_ih = uinit(keys[ki], (4 * num_cell, num_cell), num_cell); ki += 1
    w_hh = uinit(keys[ki], (4 * num_cell, num_cell), num_cell); ki += 1
    b_ih = uinit(keys[ki], (4 * num_cell,), num_cell); ki += 1
    b_hh = uinit(keys[ki], (4 * num_cell,), num_cell); ki += 1

    # fc2: Linear(512, num_action), PyTorch weight (num_action, 512)
    w_fc = uinit(keys[ki], (num_action, num_cell), num_cell); ki += 1
    b_fc = uinit(keys[ki], (num_action,), num_cell); ki += 1

    params = dict(convs=convs, w_ih=w_ih, w_hh=w_hh, b_ih=b_ih, b_hh=b_hh,
                  w_fc=w_fc, b_fc=b_fc)

    # Input in the PyTorch convention NCHW: (batch*trainLength, 1, 84, 84)
    x_nchw = jax.random.normal(keys[ki], (N, 1, H0, W0), jnp.float32); ki += 1

    out = lstm_net_forward(x_nchw, params, keep_rate, trainLength, num_cell,
                           batch_size)
    out = jax.block_until_ready(out)
    assert out.shape == (batch_size * trainLength, num_action)
    assert bool(jnp.all(jnp.isfinite(out)))
    print("KERNEL_OK")
</pallas_src>

<mosaic_0001>
module attributes {stable_mosaic.version = 11 : i64} {
  func.func @_matmul_bias_kernel(%arg0: i32, %arg1: memref<512x64xbf16, #tpu.memory_space<vmem>>, %arg2: memref<64x128xbf16, #tpu.memory_space<vmem>>, %arg3: memref<1x128xf32, #tpu.memory_space<vmem>>, %arg4: memref<512x128xbf16, #tpu.memory_space<vmem>>) attributes {dimension_semantics = [#tpu.dimension_semantics<parallel>], iteration_bounds = array<i64: 7>, scalar_prefetch = 0 : i64, scratch_operands = 0 : i64, tpu.core_type = #tpu.core_type<tc>, window_params = [{transform_indices = @transform_0, window_bounds = array<i64: 512, 64>}, {pipeline_mode = #tpu.pipeline_mode<synchronous>, transform_indices = @transform_1, window_bounds = array<i64: 64, 128>}, {pipeline_mode = #tpu.pipeline_mode<synchronous>, transform_indices = @transform_2, window_bounds = array<i64: 1, 128>}, {transform_indices = @transform_3, window_bounds = array<i64: 512, 128>}]} {
    %c0 = arith.constant 0 : index
    %c0_0 = arith.constant 0 : index
    %0 = vector.load %arg1[%c0, %c0_0] : memref<512x64xbf16, #tpu.memory_space<vmem>>, vector<512x64xbf16>
    %c0_1 = arith.constant 0 : index
    %c0_2 = arith.constant 0 : index
    %1 = vector.load %arg2[%c0_1, %c0_2] : memref<64x128xbf16, #tpu.memory_space<vmem>>, vector<64x128xbf16>
    %cst = arith.constant dense<0.000000e+00> : vector<512x128xf32>
    %2 = tpu.matmul %0, %1, %cst {dimension_numbers = #tpu.dot_dimension_numbers<[1], [0], [0], [1], [0, 0, 1, 1], [], []>} : vector<512x64xbf16>, vector<64x128xbf16>, vector<512x128xf32> -> vector<512x128xf32>
    %c0_3 = arith.constant 0 : index
    %c0_4 = arith.constant 0 : index
    %3 = vector.load %arg3[%c0_3, %c0_4] : memref<1x128xf32, #tpu.memory_space<vmem>>, vector<1x128xf32>
    %4 = vector.broadcast %3 : vector<1x128xf32> to vector<512x128xf32>
    %5 = arith.addf %2, %4 : vector<512x128xf32>
    %cst_5 = arith.constant 0.000000e+00 : f32
    %6 = vector.broadcast %cst_5 : f32 to vector<512x128xf32>
    %7 = arith.maximumf %5, %6 : vector<512x128xf32>
    %8 = arith.truncf %7 : vector<512x128xf32> to vector<512x128xbf16>
    %c0_6 = arith.constant 0 : index
    %c0_7 = arith.constant 0 : index
    %9 = vector.load %arg4[%c0_6, %c0_7] : memref<512x128xbf16, #tpu.memory_space<vmem>>, vector<512x128xbf16>
    tpu.vector_store %arg4[%c0_6, %c0_7], %8 {strides = array<i32>} : memref<512x128xbf16, #tpu.memory_space<vmem>>, vector<512x128xbf16>,
    return
  }
  func.func @transform_0(%arg0: i32) -> (i32, i32) {
    %c0_i32 = arith.constant 0 : i32
    %c0_i32_0 = arith.constant 0 : i32
    return %arg0, %c0_i32 : i32, i32
  }
  func.func @transform_1(%arg0: i32) -> (i32, i32) {
    %c0_i32 = arith.constant 0 : i32
    %c0_i32_0 = arith.constant 0 : i32
    %c0_i32_1 = arith.constant 0 : i32
    return %c0_i32, %c0_i32_0 : i32, i32
  }
  func.func @transform_2(%arg0: i32) -> (i32, i32) {
    %c0_i32 = arith.constant 0 : i32
    %c0_i32_0 = arith.constant 0 : i32
    %c0_i32_1 = arith.constant 0 : i32
    return %c0_i32, %c0_i32_0 : i32, i32
  }
  func.func @transform_3(%arg0: i32) -> (i32, i32) {
    %c0_i32 = arith.constant 0 : i32
    %c0_i32_0 = arith.constant 0 : i32
    return %arg0, %c0_i32 : i32, i32
  }
}

</mosaic_0001>

<llo_original>
// kernel: tpu_custom_call.1
$region0: #{tpu_custom_call.1}
  #allocation0 [shape = 'u32[]', space=smem, size = 0x4, offset = 0x4, fixed_abs, tag = 'smem constant byte address 0x4 - core index']
  #allocation1 [shape = 'u32[144,128]{1,0:T(1,128)}', space=vmem, size = 0x12000, scoped, tag = 'internal scratch']
  %s0 = inlined_call_operand.vmem [shape: bf16[3584,64], index: 0, kind: input, shape index: {}]
  %s1 = inlined_call_operand.vmem [shape: bf16[64,128], index: 1, kind: input, shape index: {}]
  %s2 = inlined_call_operand.vmem [shape: f32[1,128], index: 2, kind: input, shape index: {}]
  %s3 = inlined_call_operand.hbm [shape: bf16[3584,128], index: 3, kind: output, shape index: {}]
  %s4 = sld [smem:[#allocation0]]
  $region45: #{tpu_custom_call.1} parent=0
    _
  %s6 = ssub.s32 1, %s4
  %s7 = scalar_select 0, %s6, %s4
  $region1: #{tpu_custom_call.1} parent=0
    #allocation2 [shape = 'u8[262144]{0}', space=vmem, size = 0x40000, scoped, tag = 'output window, operand 0']
    #allocation3 [shape = 's32[2]{0}', space=sflag, size = 0x8, scoped, tag = 'scoped memory for tpu_custom_call.1']
    %8 = vsyncpa [#allocation3], 0
    %s9 = scalar_lea.sflag [#allocation3], 1
    %10 = vsyncpa %s9, 0
    loop: start=0, step=1, limit=9
    $region2: #{tpu_custom_call.1} parent=1 // loop_pre_header
      _
    $region3: #{tpu_custom_call.1} parent=1 // loop_header
      %s12 = sphi 0, %s16
      %p13 = scmp.ge.s32.totalorder %s12, 9
      %s22 = sphi 0, %s24
      %s25 = sphi 0, %s22
      %s26 = sphi 0, %s25
      %s42 = sphi 0, %s26
      %s46 = sphi 0, %s46
      %s48 = sphi 0, %s46
      %s49 = sphi 0, %s48
      %s63 = sphi 0, %s49
      %s67 = sphi 0, %s67
      %s69 = sphi 0, %s67
      %s70 = sphi 0, %s69
      %s84 = sphi 0, %s70
      %s90 = sphi 0, %s92
      %s93 = sphi 0, %s90
      %s94 = sphi 0, %s93
      %s110 = sphi 0, %s94
    $region4: #{tpu_custom_call.1} parent=1 // loop_header_branch
      %15 = sbr.rel (%p13) target = $region8
    $region5: #{tpu_custom_call.1} parent=1 // loop_body
      %s17 = ssub.s32 %s12, 1
      %s18 = ssub.s32 %s12, 2
      %s19 = sadd.s32 %s12, 1
      %s20 = ssub.s32 %s12, %s19
      %p21 = scmp.eq.s32.totalorder %s20, 0
      %s23 = sadd.s32 %s22, 1
      %s24 = scalar_select %p21, %s22, %s23
      %p27 = pneg %p21
      %p28 = scmp.eq.s32.totalorder %s12, 6
      %p29 = por %p27, %p28
      %p30 = scmp.ne.s32.totalorder %s22, %s25
      %p31 = scmp.eq.s32.totalorder %s12, 0
      %p32 = por %p30, %p31
      %p33 = scmp.ne.s32.totalorder %s22, %s25
      %p34 = scmp.eq.s32.totalorder %s17, 6
      %p35 = por %p33, %p34
      %p36 = scmp.ne.s32.totalorder %s25, %s26
      %p37 = scmp.eq.s32.totalorder %s17, 0
      %p38 = por %p36, %p37
      %p39 = scmp.ne.s32.totalorder %s25, %s26
      %p40 = scmp.eq.s32.totalorder %s18, 6
      %p41 = por %p39, %p40
      %p43 = scmp.ne.s32.totalorder %s26, %s42
      %p44 = scmp.eq.s32.totalorder %s18, 0
      %p45 = por %p43, %p44
      %s47 = sadd.s32 %s46, 1
      %p50 = scmp.eq.s32.totalorder %s12, 6
      %p51 = scmp.ne.s32.totalorder %s46, %s48
      %p52 = scmp.eq.s32.totalorder %s12, 0
      %p53 = por %p51, %p52
      %p54 = scmp.ne.s32.totalorder %s46, %s48
      %p55 = scmp.eq.s32.totalorder %s17, 6
      %p56 = por %p54, %p55
      %p57 = scmp.ne.s32.totalorder %s48, %s49
      %p58 = scmp.eq.s32.totalorder %s17, 0
      %p59 = por %p57, %p58
      %p60 = scmp.ne.s32.totalorder %s48, %s49
      %p61 = scmp.eq.s32.totalorder %s18, 6
      %p62 = por %p60, %p61
      %p64 = scmp.ne.s32.totalorder %s49, %s63
      %p65 = scmp.eq.s32.totalorder %s18, 0
      %p66 = por %p64, %p65
      %s68 = sadd.s32 %s67, 1
      %p71 = scmp.eq.s32.totalorder %s12, 6
      %p72 = scmp.ne.s32.totalorder %s67, %s69
      %p73 = scmp.eq.s32.totalorder %s12, 0
      %p74 = por %p72, %p73
      %p75 = scmp.ne.s32.totalorder %s67, %s69
      %p76 = scmp.eq.s32.totalorder %s17, 6
      %p77 = por %p75, %p76
      %p78 = scmp.ne.s32.totalorder %s69, %s70
      %p79 = scmp.eq.s32.totalorder %s17, 0
      %p80 = por %p78, %p79
      %p81 = scmp.ne.s32.totalorder %s69, %s70
      %p82 = scmp.eq.s32.totalorder %s18, 6
      %p83 = por %p81, %p82
      %p85 = scmp.ne.s32.totalorder %s70, %s84
      %p86 = scmp.eq.s32.totalorder %s18, 0
      %p87 = por %p85, %p86
      %s88 = ssub.s32 %s12, %s19
      %p89 = scmp.eq.s32.totalorder %s88, 0
      %s91 = sadd.s32 %s90, 1
      %s92 = scalar_select %p89, %s90, %s91
      %p95 = pneg %p89
      %p96 = scmp.eq.s32.totalorder %s12, 6
      %p97 = por %p95, %p96
      %p98 = scmp.ne.s32.totalorder %s90, %s93
      %p99 = scmp.eq.s32.totalorder %s12, 0
      %p100 = por %p98, %p99
      %p101 = scmp.ne.s32.totalorder %s90, %s93
      %p102 = scmp.eq.s32.totalorder %s17, 6
      %p103 = por %p101, %p102
      %p104 = scmp.ne.s32.totalorder %s93, %s94
      %p105 = scmp.eq.s32.totalorder %s17, 0
      %p106 = por %p104, %p105
      %p107 = scmp.ne.s32.totalorder %s93, %s94
      %p108 = scmp.eq.s32.totalorder %s18, 6
      %p109 = por %p107, %p108
      %p111 = scmp.ne.s32.totalorder %s94, %s110
      %p112 = scmp.eq.s32.totalorder %s18, 0
      %p113 = por %p111, %p112
      %p114 = scmp.le.s32.totalorder 1, %s12
      %p115 = scmp.lt.s32.totalorder %s12, 8
      %p116 = pnand %p114, %p115
      %p117 = pneg %p116
      // Predicated region
      $region9: #{tpu_custom_call.1} parent=5 // pred_check
        _
      $region10: #{tpu_custom_call.1} parent=5 // pred_check_branch
        %119 = sbr.rel (%p116) target = $region12
      $region11: #{tpu_custom_call.1} parent=5 // pred_region
        %s120 = ssub.s32 %s12, 1
        // Predicated region
        $region13: #{tpu_custom_call.1} parent=11 // pred_check
          %p121 = pneg %p59
        $region14: #{tpu_custom_call.1} parent=11 // pred_check_branch
          %123 = sbr.rel (%p121) target = $region16
        $region15: #{tpu_custom_call.1} parent=11 // pred_region
          _
        $region16: #{tpu_custom_call.1} parent=11 // pred_fallthru
          _
        // Predicated region
        $region17: #{tpu_custom_call.1} parent=11 // pred_check
          %p124 = pneg %p80
        $region18: #{tpu_custom_call.1} parent=11 // pred_check_branch
          %126 = sbr.rel (%p124) target = $region20
        $region19: #{tpu_custom_call.1} parent=11 // pred_region
          _
        $region20: #{tpu_custom_call.1} parent=11 // pred_fallthru
          _
      $region12: #{tpu_custom_call.1} parent=5 // pred_fallthru
        _
      %p127 = scmp.lt.s32.totalorder %s12, 7
      // Predicated region
      $region21: #{tpu_custom_call.1} parent=5 // pred_check
        %p128 = pneg %p127
      $region22: #{tpu_custom_call.1} parent=5 // pred_check_branch
        %130 = sbr.rel (%p128) target = $region24
      $region23: #{tpu_custom_call.1} parent=5 // pred_region
        // Predicated region
        $region25: #{tpu_custom_call.1} parent=23 // pred_check
          %p131 = pneg %p32
        $region26: #{tpu_custom_call.1} parent=23 // pred_check_branch
          %133 = sbr.rel (%p131) target = $region28
        $region27: #{tpu_custom_call.1} parent=23 // pred_region
          %s134 = smul.u32 64, %s12
          %p135 = scmp.lt.s32.totalorder %s134, 447
          %s136 = scalar_select %p135, %s134, 447
          %s137 = smul.addr %s136, 4
          %s138 = scalar_lea.vmem %s0, %s137
          %s139 = smul.u32 64, %s12
        $region28: #{tpu_custom_call.1} parent=23 // pred_fallthru
          _
      $region24: #{tpu_custom_call.1} parent=5 // pred_fallthru
        _
      %p140 = scmp.le.s32.totalorder 1, %s12
      %p141 = scmp.lt.s32.totalorder %s12, 8
      %p142 = pnand %p140, %p141
      %p143 = pneg %p142
      // Predicated region
      $region29: #{tpu_custom_call.1} parent=5 // pred_check
        _
      $region30: #{tpu_custom_call.1} parent=5 // pred_check_branch
        %145 = sbr.rel (%p142) target = $region32
      $region31: #{tpu_custom_call.1} parent=5 // pred_region
        %s146 = ssub.s32 %s12, 1
        %s147 = smul.u32 64, %s17
        %p148 = scmp.lt.s32.totalorder %s147, 447
        %s149 = scalar_select %p148, %s147, 447
        %s150 = smul.addr %s149, 4
        %s151 = scalar_lea.vmem %s0, %s150
        %p152 = pneg %p38
        %p153 = pneg %p35
        %p154 = pneg %p59
        %p155 = pneg %p56
        %p156 = pneg %p80
        %p157 = pneg %p77
        %p158 = pneg %p106
        %p159 = pneg %p103
        %s160 = sand.u32 %s93, 1
        %s161 = scalar_lea.sflag [#allocation3], %s160
        %s162 = sand.u32 %s93, 1
        %s163 = smul.addr %s162, 256
        %s164 = scalar_lea.vmem [#allocation2], %s163
        %s165 = smul.u32 64, %s17
        %p166 = scmp.lt.s32.totalorder %s165, 447
        %s167 = scalar_select %p166, %s165, 447
        %s168 = smul.addr %s167, 4
        %s169 = scalar_lea.vmem %s0, %s168
        %s170 = smul.u32 64, %s17
        %s171 = smul.u32 64, %s17
        %v173 = vld [vmem:[%s169] sm:$0xf]
        %v174 = vld [vmem:[%s169 + $0x4] sm:$0xf]
        %v175 = vld [vmem:[%s169 + $0x8] sm:$0xf]
        %v176 = vld [vmem:[%s169 + $0xc] sm:$0xf]
        %v177 = vld [vmem:[%s169 + $0x10] sm:$0xf]
        %v178 = vld [vmem:[%s169 + $0x14] sm:$0xf]
        %v179 = vld [vmem:[%s169 + $0x18] sm:$0xf]
        %v180 = vld [vmem:[%s169 + $0x1c] sm:$0xf]
        %v181 = vld [vmem:[%s169 + $0x20] sm:$0xf]
        %v182 = vld [vmem:[%s169 + $0x24] sm:$0xf]
        %v183 = vld [vmem:[%s169 + $0x28] sm:$0xf]
        %v184 = vld [vmem:[%s169 + $0x2c] sm:$0xf]
        %v185 = vld [vmem:[%s169 + $0x30] sm:$0xf]
        %v186 = vld [vmem:[%s169 + $0x34] sm:$0xf]
        %v187 = vld [vmem:[%s169 + $0x38] sm:$0xf]
        %v188 = vld [vmem:[%s169 + $0x3c] sm:$0xf]
        %v189 = vld [vmem:[%s169 + $0x40] sm:$0xf]
        %v190 = vld [vmem:[%s169 + $0x44] sm:$0xf]
        %v191 = vld [vmem:[%s169 + $0x48] sm:$0xf]
        %v192 = vld [vmem:[%s169 + $0x4c] sm:$0xf]
        %v193 = vld [vmem:[%s169 + $0x50] sm:$0xf]
        %v194 = vld [vmem:[%s169 + $0x54] sm:$0xf]
        %v195 = vld [vmem:[%s169 + $0x58] sm:$0xf]
        %v196 = vld [vmem:[%s169 + $0x5c] sm:$0xf]
        %v197 = vld [vmem:[%s169 + $0x60] sm:$0xf]
        %v198 = vld [vmem:[%s169 + $0x64] sm:$0xf]
        %v199 = vld [vmem:[%s169 + $0x68] sm:$0xf]
        %v200 = vld [vmem:[%s169 + $0x6c] sm:$0xf]
        %v201 = vld [vmem:[%s169 + $0x70] sm:$0xf]
        %v202 = vld [vmem:[%s169 + $0x74] sm:$0xf]
        %v203 = vld [vmem:[%s169 + $0x78] sm:$0xf]
        %v204 = vld [vmem:[%s169 + $0x7c] sm:$0xf]
        %v205 = vld [vmem:[%s169 + $0x80] sm:$0xf]
        %v206 = vld [vmem:[%s169 + $0x84] sm:$0xf]
        %v207 = vld [vmem:[%s169 + $0x88] sm:$0xf]
        %v208 = vld [vmem:[%s169 + $0x8c] sm:$0xf]
        %v209 = vld [vmem:[%s169 + $0x90] sm:$0xf]
        %v210 = vld [vmem:[%s169 + $0x94] sm:$0xf]
        %v211 = vld [vmem:[%s169 + $0x98] sm:$0xf]
        %v212 = vld [vmem:[%s169 + $0x9c] sm:$0xf]
        %v213 = vld [vmem:[%s169 + $0xa0] sm:$0xf]
        %v214 = vld [vmem:[%s169 + $0xa4] sm:$0xf]
        %v215 = vld [vmem:[%s169 + $0xa8] sm:$0xf]
        %v216 = vld [vmem:[%s169 + $0xac] sm:$0xf]
        %v217 = vld [vmem:[%s169 + $0xb0] sm:$0xf]
        %v218 = vld [vmem:[%s169 + $0xb4] sm:$0xf]
        %v219 = vld [vmem:[%s169 + $0xb8] sm:$0xf]
        %v220 = vld [vmem:[%s169 + $0xbc] sm:$0xf]
        %v221 = vld [vmem:[%s169 + $0xc0] sm:$0xf]
        %v222 = vld [vmem:[%s169 + $0xc4] sm:$0xf]
        %v223 = vld [vmem:[%s169 + $0xc8] sm:$0xf]
        %v224 = vld [vmem:[%s169 + $0xcc] sm:$0xf]
        %v225 = vld [vmem:[%s169 + $0xd0] sm:$0xf]
        %v226 = vld [vmem:[%s169 + $0xd4] sm:$0xf]
        %v227 = vld [vmem:[%s169 + $0xd8] sm:$0xf]
        %v228 = vld [vmem:[%s169 + $0xdc] sm:$0xf]
        %v229 = vld [vmem:[%s169 + $0xe0] sm:$0xf]
        %v230 = vld [vmem:[%s169 + $0xe4] sm:$0xf]
        %v231 = vld [vmem:[%s169 + $0xe8] sm:$0xf]
        %v232 = vld [vmem:[%s169 + $0xec] sm:$0xf]
        %v233 = vld [vmem:[%s169 + $0xf0] sm:$0xf]
        %v234 = vld [vmem:[%s169 + $0xf4] sm:$0xf]
        %v235 = vld [vmem:[%s169 + $0xf8] sm:$0xf]
        %v236 = vld [vmem:[%s169 + $0xfc] sm:$0xf]
        %v237 = vld [vmem:[%s1] sm:$0xf]
        %v238 = vld [vmem:[%s1 + $0x4] sm:$0xf]
        %v239 = vld [vmem:[%s1 + $0x8] sm:$0xf]
        %v240 = vld [vmem:[%s1 + $0xc] sm:$0xf]
        %v241 = vld [vmem:[%s1 + $0x10] sm:$0xf]
        %v242 = vld [vmem:[%s1 + $0x14] sm:$0xf]
        %v243 = vld [vmem:[%s1 + $0x18] sm:$0xf]
        %v244 = vld [vmem:[%s1 + $0x1c] sm:$0xf]
        %v245 = vld [vmem:[%s2] sm:$0x1]
        %v247 = vlaneseq
        %v248 = vshrl.u32 %v247, 7
        %v249 = vsub.s32 0, %v248
        %v250 = vrot.slane %v245, %v249
        %v316 = vunpack.c.l.b16 %v173
        %v317 = vunpack.c.l.b16 %v174
        %v318 = vunpack.c.l.b16 %v175
        %v319 = vunpack.c.l.b16 %v176
        %v320 = vunpack.c.l.b16 %v177
        %v321 = vunpack.c.l.b16 %v178
        %v322 = vunpack.c.l.b16 %v179
        %v323 = vunpack.c.l.b16 %v180
        %v324 = vunpack.c.l.b16 %v181
        %v325 = vunpack.c.l.b16 %v182
        %v326 = vunpack.c.l.b16 %v183
        %v327 = vunpack.c.l.b16 %v184
        %v328 = vunpack.c.l.b16 %v185
        %v329 = vunpack.c.l.b16 %v186
        %v330 = vunpack.c.l.b16 %v187
        %v331 = vunpack.c.l.b16 %v188
        %v332 = vunpack.c.l.b16 %v189
        %v333 = vunpack.c.l.b16 %v190
        %v334 = vunpack.c.l.b16 %v191
        %v335 = vunpack.c.l.b16 %v192
        %v336 = vunpack.c.l.b16 %v193
        %v337 = vunpack.c.l.b16 %v194
        %v338 = vunpack.c.l.b16 %v195
        %v339 = vunpack.c.l.b16 %v196
        %v340 = vunpack.c.l.b16 %v197
        %v341 = vunpack.c.l.b16 %v198
        %v342 = vunpack.c.l.b16 %v199
        %v343 = vunpack.c.l.b16 %v200
        %v344 = vunpack.c.l.b16 %v201
        %v345 = vunpack.c.l.b16 %v202
        %v346 = vunpack.c.l.b16 %v203
        %v347 = vunpack.c.l.b16 %v204
        %v348 = vunpack.c.l.b16 %v205
        %v349 = vunpack.c.l.b16 %v206
        %v350 = vunpack.c.l.b16 %v207
        %v351 = vunpack.c.l.b16 %v208
        %v352 = vunpack.c.l.b16 %v209
        %v353 = vunpack.c.l.b16 %v210
        %v354 = vunpack.c.l.b16 %v211
        %v355 = vunpack.c.l.b16 %v212
        %v356 = vunpack.c.l.b16 %v213
        %v357 = vunpack.c.l.b16 %v214
        %v358 = vunpack.c.l.b16 %v215
        %v359 = vunpack.c.l.b16 %v216
        %v360 = vunpack.c.l.b16 %v217
        %v361 = vunpack.c.l.b16 %v218
        %v362 = vunpack.c.l.b16 %v219
        %v363 = vunpack.c.l.b16 %v220
        %v364 = vunpack.c.l.b16 %v221
        %v365 = vunpack.c.l.b16 %v222
        %v366 = vunpack.c.l.b16 %v223
        %v367 = vunpack.c.l.b16 %v224
        %v368 = vunpack.c.l.b16 %v225
        %v369 = vunpack.c.l.b16 %v226
        %v370 = vunpack.c.l.b16 %v227
        %v371 = vunpack.c.l.b16 %v228
        %v372 = vunpack.c.l.b16 %v229
        %v373 = vunpack.c.l.b16 %v230
        %v374 = vunpack.c.l.b16 %v231
        %v375 = vunpack.c.l.b16 %v232
        %v376 = vunpack.c.l.b16 %v233
        %v377 = vunpack.c.l.b16 %v234
        %v378 = vunpack.c.l.b16 %v235
        %v379 = vunpack.c.l.b16 %v236
        %v380 = vpack.c.b16 %v317, %v316
        %v381 = vpack.c.b16 %v319, %v318
        %v382 = vpack.c.b16 %v321, %v320
        %v383 = vpack.c.b16 %v323, %v322
        %v384 = vpack.c.b16 %v325, %v324
        %v385 = vpack.c.b16 %v327, %v326
        %v386 = vpack.c.b16 %v329, %v328
        %v387 = vpack.c.b16 %v331, %v330
        %v388 = vpack.c.b16 %v333, %v332
        %v389 = vpack.c.b16 %v335, %v334
        %v390 = vpack.c.b16 %v337, %v336
        %v391 = vpack.c.b16 %v339, %v338
        %v392 = vpack.c.b16 %v341, %v340
        %v393 = vpack.c.b16 %v343, %v342
        %v394 = vpack.c.b16 %v345, %v344
        %v395 = vpack.c.b16 %v347, %v346
        %v396 = vpack.c.b16 %v349, %v348
        %v397 = vpack.c.b16 %v351, %v350
        %v398 = vpack.c.b16 %v353, %v352
        %v399 = vpack.c.b16 %v355, %v354
        %v400 = vpack.c.b16 %v357, %v356
        %v401 = vpack.c.b16 %v359, %v358
        %v402 = vpack.c.b16 %v361, %v360
        %v403 = vpack.c.b16 %v363, %v362
        %v404 = vpack.c.b16 %v365, %v364
        %v405 = vpack.c.b16 %v367, %v366
        %v406 = vpack.c.b16 %v369, %v368
        %v407 = vpack.c.b16 %v371, %v370
        %v408 = vpack.c.b16 %v373, %v372
        %v409 = vpack.c.b16 %v375, %v374
        %v410 = vpack.c.b16 %v377, %v376
        %v411 = vpack.c.b16 %v379, %v378
        %v420 = vunpack.c.l.b16 %v237
        %v421 = vunpack.c.l.b16 %v238
        %v422 = vunpack.c.l.b16 %v239
        %v423 = vunpack.c.l.b16 %v240
        %v424 = vunpack.c.l.b16 %v241
        %v425 = vunpack.c.l.b16 %v242
        %v426 = vunpack.c.l.b16 %v243
        %v427 = vunpack.c.l.b16 %v244
        %v428 = vpack.c.b16 %v421, %v420
        %v429 = vpack.c.b16 %v423, %v422
        %v430 = vpack.c.b16 %v425, %v424
        %v431 = vpack.c.b16 %v427, %v426
        %vm436 = vcmask 523264
        %v438 = vsel %vm436, %v380, 0
        %v441 = vsel %vm436, %v381, 0
        %v444 = vsel %vm436, %v382, 0
        %v447 = vsel %vm436, %v383, 0
        %v450 = vsel %vm436, %v384, 0
        %v453 = vsel %vm436, %v385, 0
        %v456 = vsel %vm436, %v386, 0
        %v459 = vsel %vm436, %v387, 0
        %v462 = vsel %vm436, %v388, 0
        %v465 = vsel %vm436, %v389, 0
        %v468 = vsel %vm436, %v390, 0
        %v471 = vsel %vm436, %v391, 0
        %v474 = vsel %vm436, %v392, 0
        %v477 = vsel %vm436, %v393, 0
        %v480 = vsel %vm436, %v394, 0
        %v483 = vsel %vm436, %v395, 0
        %v486 = vsel %vm436, %v396, 0
        %v489 = vsel %vm436, %v397, 0
        %v492 = vsel %vm436, %v398, 0
        %v495 = vsel %vm436, %v399, 0
        %v498 = vsel %vm436, %v400, 0
        %v501 = vsel %vm436, %v401, 0
        %v504 = vsel %vm436, %v402, 0
        %v507 = vsel %vm436, %v403, 0
        %v510 = vsel %vm436, %v404, 0
        %v513 = vsel %vm436, %v405, 0
        %v516 = vsel %vm436, %v406, 0
        %v519 = vsel %vm436, %v407, 0
        %v522 = vsel %vm436, %v408, 0
        %v525 = vsel %vm436, %v409, 0
        %v528 = vsel %vm436, %v410, 0
        %v531 = vsel %vm436, %v411, 0
        %533 = vmatprep.subr.bf16.mxu0 0
        %534 = vmatpush1.bf16.msra.mxu0 0
        %535 = vmatprep.subr.bf16.mxu0 0
        %536 = vmatpush1.bf16.msra.mxu0 0
        %537 = vmatprep.subr.bf16.mxu0 0
        %538 = vmatpush1.bf16.msra.mxu0 0
        %539 = vmatprep.subr.bf16.mxu0 0
        %540 = vmatpush1.bf16.msra.mxu0 0
        %541 = vmatprep.subr.bf16.mxu0 0
        %542 = vmatpush1.bf16.msra.mxu0 %v431
        %543 = vmatprep.subr.bf16.mxu0 0
        %544 = vmatpush1.bf16.msra.mxu0 %v430
        %545 = vmatprep.subr.bf16.mxu0 0
        %546 = vmatpush1.bf16.msra.mxu0 %v429
        %547 = vmatprep.subr.bf16.mxu0 0
        %548 = vmatpush1.bf16.msra.mxu0 %v428
        %549 = vmatprep.subr.bf16.mxu0 0
        %550 = vmatpush2.bf16.msra.mxu0 0
        %551 = vmatprep.subr.bf16.mxu0 0
        %552 = vmatpush2.bf16.msra.mxu0 0
        %553 = vmatprep.subr.bf16.mxu0 0
        %554 = vmatpush2.bf16.msra.mxu0 0
        %555 = vmatprep.subr.bf16.mxu0 0
        %556 = vmatpush2.bf16.msra.mxu0 0
        %557 = vmatprep.subr.bf16.mxu0 0
        %558 = vmatpush2.bf16.msra.mxu0 0
        %559 = vmatprep.subr.bf16.mxu0 0
        %560 = vmatpush2.bf16.msra.mxu0 0
        %561 = vmatprep.subr.bf16.mxu0 0
        %562 = vmatpush2.bf16.msra.mxu0 0
        %563 = vmatprep.subr.bf16.mxu0 0
        %564 = vmatpush2.bf16.msra.mxu0 0
        %565 = vmatprep.mubr.bf16.mxu0 0
        %566 = vmatmul.mubr.bf16.gmra.mxu0 %v438
        %v567 = vpop.f32.mrf.mxu0
        %v568 = vadd.f32 %v250, %v567
        %v569 = vpop.f32.mrf.mxu0
        %v570 = vpop.f32.mrf.mxu0
        %v571 = vadd.f32 %v250, %v570
        %v572 = vpop.f32.mrf.mxu0
        %573 = vmatprep.mubr.bf16.mxu0 0
        %574 = vmatmul.mubr.bf16.gmra.mxu0 %v441
        %v575 = vpop.f32.mrf.mxu0
        %v576 = vadd.f32 %v250, %v575
        %v577 = vpop.f32.mrf.mxu0
        %v578 = vpop.f32.mrf.mxu0
        %v579 = vadd.f32 %v250, %v578
        %v580 = vpop.f32.mrf.mxu0
        %581 = vmatprep.mubr.bf16.mxu0 0
        %582 = vmatmul.mubr.bf16.gmra.mxu0 %v444
        %v583 = vpop.f32.mrf.mxu0
        %v584 = vadd.f32 %v250, %v583
        %v585 = vpop.f32.mrf.mxu0
        %v586 = vpop.f32.mrf.mxu0
        %v587 = vadd.f32 %v250, %v586
        %v588 = vpop.f32.mrf.mxu0
        %589 = vmatprep.mubr.bf16.mxu0 0
        %590 = vmatmul.mubr.bf16.gmra.mxu0 %v447
        %v591 = vpop.f32.mrf.mxu0
        %v592 = vadd.f32 %v250, %v591
        %v593 = vpop.f32.mrf.mxu0
        %v594 = vpop.f32.mrf.mxu0
        %v595 = vadd.f32 %v250, %v594
        %v596 = vpop.f32.mrf.mxu0
        %597 = vmatprep.mubr.bf16.mxu0 0
        %598 = vmatmul.mubr.bf16.gmra.mxu0 %v450
        %v599 = vpop.f32.mrf.mxu0
        %v600 = vadd.f32 %v250, %v599
        %v601 = vpop.f32.mrf.mxu0
        %v602 = vpop.f32.mrf.mxu0
        %v603 = vadd.f32 %v250, %v602
        %v604 = vpop.f32.mrf.mxu0
        %605 = vmatprep.mubr.bf16.mxu0 0
        %606 = vmatmul.mubr.bf16.gmra.mxu0 %v453
        %v607 = vpop.f32.mrf.mxu0
        %v608 = vadd.f32 %v250, %v607
        %v609 = vpop.f32.mrf.mxu0
        %v610 = vpop.f32.mrf.mxu0
        %v611 = vadd.f32 %v250, %v610
        %v612 = vpop.f32.mrf.mxu0
        %613 = vmatprep.mubr.bf16.mxu0 0
        %614 = vmatmul.mubr.bf16.gmra.mxu0 %v456
        %v615 = vpop.f32.mrf.mxu0
        %v616 = vadd.f32 %v250, %v615
        %v617 = vpop.f32.mrf.mxu0
        %v618 = vpop.f32.mrf.mxu0
        %v619 = vadd.f32 %v250, %v618
        %v620 = vpop.f32.mrf.mxu0
        %621 = vmatprep.mubr.bf16.mxu0 0
        %622 = vmatmul.mubr.bf16.gmra.mxu0 %v459
        %v623 = vpop.f32.mrf.mxu0
        %v624 = vadd.f32 %v250, %v623
        %v625 = vpop.f32.mrf.mxu0
        %v626 = vpop.f32.mrf.mxu0
        %v627 = vadd.f32 %v250, %v626
        %v628 = vpop.f32.mrf.mxu0
        %629 = vmatprep.mubr.bf16.mxu0 0
        %630 = vmatmul.mubr.bf16.gmra.mxu0 %v462
        %v631 = vpop.f32.mrf.mxu0
        %v632 = vadd.f32 %v250, %v631
        %v633 = vpop.f32.mrf.mxu0
        %v634 = vpop.f32.mrf.mxu0
        %v635 = vadd.f32 %v250, %v634
        %v636 = vpop.f32.mrf.mxu0
        %637 = vmatprep.mubr.bf16.mxu0 0
        %638 = vmatmul.mubr.bf16.gmra.mxu0 %v465
        %v639 = vpop.f32.mrf.mxu0
        %v640 = vadd.f32 %v250, %v639
        %v641 = vpop.f32.mrf.mxu0
        %v642 = vpop.f32.mrf.mxu0
        %v643 = vadd.f32 %v250, %v642
        %v644 = vpop.f32.mrf.mxu0
        %645 = vmatprep.mubr.bf16.mxu0 0
        %646 = vmatmul.mubr.bf16.gmra.mxu0 %v468
        %v647 = vpop.f32.mrf.mxu0
        %v648 = vadd.f32 %v250, %v647
        %v649 = vpop.f32.mrf.mxu0
        %v650 = vpop.f32.mrf.mxu0
        %v651 = vadd.f32 %v250, %v650
        %v652 = vpop.f32.mrf.mxu0
        %653 = vmatprep.mubr.bf16.mxu0 0
        %654 = vmatmul.mubr.bf16.gmra.mxu0 %v471
        %v655 = vpop.f32.mrf.mxu0
        %v656 = vadd.f32 %v250, %v655
        %v657 = vpop.f32.mrf.mxu0
        %v658 = vpop.f32.mrf.mxu0
        %v659 = vadd.f32 %v250, %v658
        %v660 = vpop.f32.mrf.mxu0
        %661 = vmatprep.mubr.bf16.mxu0 0
        %662 = vmatmul.mubr.bf16.gmra.mxu0 %v474
        %v663 = vpop.f32.mrf.mxu0
        %v664 = vadd.f32 %v250, %v663
        %v665 = vpop.f32.mrf.mxu0
        %v666 = vpop.f32.mrf.mxu0
        %v667 = vadd.f32 %v250, %v666
        %v668 = vpop.f32.mrf.mxu0
        %669 = vmatprep.mubr.bf16.mxu0 0
        %670 = vmatmul.mubr.bf16.gmra.mxu0 %v477
        %v671 = vpop.f32.mrf.mxu0
        %v672 = vadd.f32 %v250, %v671
        %v673 = vpop.f32.mrf.mxu0
        %v674 = vpop.f32.mrf.mxu0
        %v675 = vadd.f32 %v250, %v674
        %v676 = vpop.f32.mrf.mxu0
        %677 = vmatprep.mubr.bf16.mxu0 0
        %678 = vmatmul.mubr.bf16.gmra.mxu0 %v480
        %v679 = vpop.f32.mrf.mxu0
        %v680 = vadd.f32 %v250, %v679
        %v681 = vpop.f32.mrf.mxu0
        %v682 = vpop.f32.mrf.mxu0
        %v683 = vadd.f32 %v250, %v682
        %v684 = vpop.f32.mrf.mxu0
        %685 = vmatprep.mubr.bf16.mxu0 0
        %686 = vmatmul.mubr.bf16.gmra.mxu0 %v483
        %v687 = vpop.f32.mrf.mxu0
        %v688 = vadd.f32 %v250, %v687
        %v689 = vpop.f32.mrf.mxu0
        %v690 = vpop.f32.mrf.mxu0
        %v691 = vadd.f32 %v250, %v690
        %v692 = vpop.f32.mrf.mxu0
        %693 = vmatprep.mubr.bf16.mxu0 0
        %694 = vmatmul.mubr.bf16.gmra.mxu0 %v486
        %v695 = vpop.f32.mrf.mxu0
        %v696 = vadd.f32 %v250, %v695
        %v697 = vpop.f32.mrf.mxu0
        %v698 = vpop.f32.mrf.mxu0
        %v699 = vadd.f32 %v250, %v698
        %v700 = vpop.f32.mrf.mxu0
        %701 = vmatprep.mubr.bf16.mxu0 0
        %702 = vmatmul.mubr.bf16.gmra.mxu0 %v489
        %v703 = vpop.f32.mrf.mxu0
        %v704 = vadd.f32 %v250, %v703
        %v705 = vpop.f32.mrf.mxu0
        %v706 = vpop.f32.mrf.mxu0
        %v707 = vadd.f32 %v250, %v706
        %v708 = vpop.f32.mrf.mxu0
        %709 = vmatprep.mubr.bf16.mxu0 0
        %710 = vmatmul.mubr.bf16.gmra.mxu0 %v492
        %v711 = vpop.f32.mrf.mxu0
        %v712 = vadd.f32 %v250, %v711
        %v713 = vpop.f32.mrf.mxu0
        %v714 = vpop.f32.mrf.mxu0
        %v715 = vadd.f32 %v250, %v714
        %v716 = vpop.f32.mrf.mxu0
        %717 = vmatprep.mubr.bf16.mxu0 0
        %718 = vmatmul.mubr.bf16.gmra.mxu0 %v495
        %v719 = vpop.f32.mrf.mxu0
        %v720 = vadd.f32 %v250, %v719
        %v721 = vpop.f32.mrf.mxu0
        %v722 = vpop.f32.mrf.mxu0
        %v723 = vadd.f32 %v250, %v722
        %v724 = vpop.f32.mrf.mxu0
        %725 = vmatprep.mubr.bf16.mxu0 0
        %726 = vmatmul.mubr.bf16.gmra.mxu0 %v498
        %v727 = vpop.f32.mrf.mxu0
        %v728 = vadd.f32 %v250, %v727
        %v729 = vpop.f32.mrf.mxu0
        %v730 = vpop.f32.mrf.mxu0
        %v731 = vadd.f32 %v250, %v730
        %v732 = vpop.f32.mrf.mxu0
        %733 = vmatprep.mubr.bf16.mxu0 0
        %734 = vmatmul.mubr.bf16.gmra.mxu0 %v501
        %v735 = vpop.f32.mrf.mxu0
        %v736 = vadd.f32 %v250, %v735
        %v737 = vpop.f32.mrf.mxu0
        %v738 = vpop.f32.mrf.mxu0
        %v739 = vadd.f32 %v250, %v738
        %v740 = vpop.f32.mrf.mxu0
        %741 = vmatprep.mubr.bf16.mxu0 0
        %742 = vmatmul.mubr.bf16.gmra.mxu0 %v504
        %v743 = vpop.f32.mrf.mxu0
        %v744 = vadd.f32 %v250, %v743
        %v745 = vpop.f32.mrf.mxu0
        %v746 = vpop.f32.mrf.mxu0
        %v747 = vadd.f32 %v250, %v746
        %v748 = vpop.f32.mrf.mxu0
        %749 = vmatprep.mubr.bf16.mxu0 0
        %750 = vmatmul.mubr.bf16.gmra.mxu0 %v507
        %v751 = vpop.f32.mrf.mxu0
        %v752 = vadd.f32 %v250, %v751
        %v753 = vpop.f32.mrf.mxu0
        %v754 = vpop.f32.mrf.mxu0
        %v755 = vadd.f32 %v250, %v754
        %v756 = vpop.f32.mrf.mxu0
        %757 = vmatprep.mubr.bf16.mxu0 0
        %758 = vmatmul.mubr.bf16.gmra.mxu0 %v510
        %v759 = vpop.f32.mrf.mxu0
        %v760 = vadd.f32 %v250, %v759
        %v761 = vpop.f32.mrf.mxu0
        %v762 = vpop.f32.mrf.mxu0
        %v763 = vadd.f32 %v250, %v762
        %v764 = vpop.f32.mrf.mxu0
        %765 = vmatprep.mubr.bf16.mxu0 0
        %766 = vmatmul.mubr.bf16.gmra.mxu0 %v513
        %v767 = vpop.f32.mrf.mxu0
        %v768 = vadd.f32 %v250, %v767
        %v769 = vpop.f32.mrf.mxu0
        %v770 = vpop.f32.mrf.mxu0
        %v771 = vadd.f32 %v250, %v770
        %v772 = vpop.f32.mrf.mxu0
        %773 = vmatprep.mubr.bf16.mxu0 0
        %774 = vmatmul.mubr.bf16.gmra.mxu0 %v516
        %v775 = vpop.f32.mrf.mxu0
        %v776 = vadd.f32 %v250, %v775
        %v777 = vpop.f32.mrf.mxu0
        %v778 = vpop.f32.mrf.mxu0
        %v779 = vadd.f32 %v250, %v778
        %v780 = vpop.f32.mrf.mxu0
        %781 = vmatprep.mubr.bf16.mxu0 0
        %782 = vmatmul.mubr.bf16.gmra.mxu0 %v519
        %v783 = vpop.f32.mrf.mxu0
        %v784 = vadd.f32 %v250, %v783
        %v785 = vpop.f32.mrf.mxu0
        %v786 = vpop.f32.mrf.mxu0
        %v787 = vadd.f32 %v250, %v786
        %v788 = vpop.f32.mrf.mxu0
        %789 = vmatprep.mubr.bf16.mxu0 0
        %790 = vmatmul.mubr.bf16.gmra.mxu0 %v522
        %v791 = vpop.f32.mrf.mxu0
        %v792 = vadd.f32 %v250, %v791
        %v793 = vpop.f32.mrf.mxu0
        %v794 = vpop.f32.mrf.mxu0
        %v795 = vadd.f32 %v250, %v794
        %v796 = vpop.f32.mrf.mxu0
        %797 = vmatprep.mubr.bf16.mxu0 0
        %798 = vmatmul.mubr.bf16.gmra.mxu0 %v525
        %v799 = vpop.f32.mrf.mxu0
        %v800 = vadd.f32 %v250, %v799
        %v801 = vpop.f32.mrf.mxu0
        %v802 = vpop.f32.mrf.mxu0
        %v803 = vadd.f32 %v250, %v802
        %v804 = vpop.f32.mrf.mxu0
        %805 = vmatprep.mubr.bf16.mxu0 0
        %806 = vmatmul.mubr.bf16.gmra.mxu0 %v528
        %v807 = vpop.f32.mrf.mxu0
        %v808 = vadd.f32 %v250, %v807
        %v809 = vpop.f32.mrf.mxu0
        %v810 = vpop.f32.mrf.mxu0
        %v811 = vadd.f32 %v250, %v810
        %v812 = vpop.f32.mrf.mxu0
        %813 = vmatprep.mubr.bf16.mxu0 0
        %814 = vmatmul.mubr.bf16.gmra.mxu0 %v531
        %v815 = vpop.f32.mrf.mxu0
        %v816 = vadd.f32 %v250, %v815
        %v817 = vpop.f32.mrf.mxu0
        %v818 = vpop.f32.mrf.mxu0
        %v819 = vadd.f32 %v250, %v818
        %v820 = vpop.f32.mrf.mxu0
        %821 = vdwg.mxu0
        %v822 = vmax.f32 %v568, 0.0
        %v823 = vmax.f32 %v571, 0.0
        %v824 = vmax.f32 %v576, 0.0
        %v825 = vmax.f32 %v579, 0.0
        %v826 = vmax.f32 %v584, 0.0
        %v827 = vmax.f32 %v587, 0.0
        %v828 = vmax.f32 %v592, 0.0
        %v829 = vmax.f32 %v595, 0.0
        %v830 = vmax.f32 %v600, 0.0
        %v831 = vmax.f32 %v603, 0.0
        %v832 = vmax.f32 %v608, 0.0
        %v833 = vmax.f32 %v611, 0.0
        %v834 = vmax.f32 %v616, 0.0
        %v835 = vmax.f32 %v619, 0.0
        %v836 = vmax.f32 %v624, 0.0
        %v837 = vmax.f32 %v627, 0.0
        %v838 = vmax.f32 %v632, 0.0
        %v839 = vmax.f32 %v635, 0.0
        %v840 = vmax.f32 %v640, 0.0
        %v841 = vmax.f32 %v643, 0.0
        %v842 = vmax.f32 %v648, 0.0
        %v843 = vmax.f32 %v651, 0.0
        %v844 = vmax.f32 %v656, 0.0
        %v845 = vmax.f32 %v659, 0.0
        %v846 = vmax.f32 %v664, 0.0
        %v847 = vmax.f32 %v667, 0.0
        %v848 = vmax.f32 %v672, 0.0
        %v849 = vmax.f32 %v675, 0.0
        %v850 = vmax.f32 %v680, 0.0
        %v851 = vmax.f32 %v683, 0.0
        %v852 = vmax.f32 %v688, 0.0
        %v853 = vmax.f32 %v691, 0.0
        %v854 = vmax.f32 %v696, 0.0
        %v855 = vmax.f32 %v699, 0.0
        %v856 = vmax.f32 %v704, 0.0
        %v857 = vmax.f32 %v707, 0.0
        %v858 = vmax.f32 %v712, 0.0
        %v859 = vmax.f32 %v715, 0.0
        %v860 = vmax.f32 %v720, 0.0
        %v861 = vmax.f32 %v723, 0.0
        %v862 = vmax.f32 %v728, 0.0
        %v863 = vmax.f32 %v731, 0.0
        %v864 = vmax.f32 %v736, 0.0
        %v865 = vmax.f32 %v739, 0.0
        %v866 = vmax.f32 %v744, 0.0
        %v867 = vmax.f32 %v747, 0.0
        %v868 = vmax.f32 %v752, 0.0
        %v869 = vmax.f32 %v755, 0.0
        %v870 = vmax.f32 %v760, 0.0
        %v871 = vmax.f32 %v763, 0.0
        %v872 = vmax.f32 %v768, 0.0
        %v873 = vmax.f32 %v771, 0.0
        %v874 = vmax.f32 %v776, 0.0
        %v875 = vmax.f32 %v779, 0.0
        %v876 = vmax.f32 %v784, 0.0
        %v877 = vmax.f32 %v787, 0.0
        %v878 = vmax.f32 %v792, 0.0
        %v879 = vmax.f32 %v795, 0.0
        %v880 = vmax.f32 %v800, 0.0
        %v881 = vmax.f32 %v803, 0.0
        %v882 = vmax.f32 %v808, 0.0
        %v883 = vmax.f32 %v811, 0.0
        %v884 = vmax.f32 %v816, 0.0
        %v885 = vmax.f32 %v819, 0.0
        %v886 = vpack.c.bf16 %v823, %v822
        %v887 = vpack.c.bf16 %v825, %v824
        %v888 = vpack.c.bf16 %v827, %v826
        %v889 = vpack.c.bf16 %v829, %v828
        %v890 = vpack.c.bf16 %v831, %v830
        %v891 = vpack.c.bf16 %v833, %v832
        %v892 = vpack.c.bf16 %v835, %v834
        %v893 = vpack.c.bf16 %v837, %v836
        %v894 = vpack.c.bf16 %v839, %v838
        %v895 = vpack.c.bf16 %v841, %v840
        %v896 = vpack.c.bf16 %v843, %v842
        %v897 = vpack.c.bf16 %v845, %v844
        %v898 = vpack.c.bf16 %v847, %v846
        %v899 = vpack.c.bf16 %v849, %v848
        %v900 = vpack.c.bf16 %v851, %v850
        %v901 = vpack.c.bf16 %v853, %v852
        %v902 = vpack.c.bf16 %v855, %v854
        %v903 = vpack.c.bf16 %v857, %v856
        %v904 = vpack.c.bf16 %v859, %v858
        %v905 = vpack.c.bf16 %v861, %v860
        %v906 = vpack.c.bf16 %v863, %v862
        %v907 = vpack.c.bf16 %v865, %v864
        %v908 = vpack.c.bf16 %v867, %v866
        %v909 = vpack.c.bf16 %v869, %v868
        %v910 = vpack.c.bf16 %v871, %v870
        %v911 = vpack.c.bf16 %v873, %v872
        %v912 = vpack.c.bf16 %v875, %v874
        %v913 = vpack.c.bf16 %v877, %v876
        %v914 = vpack.c.bf16 %v879, %v878
        %v915 = vpack.c.bf16 %v881, %v880
        %v916 = vpack.c.bf16 %v883, %v882
        %v917 = vpack.c.bf16 %v885, %v884
        %v950 = vunpack.c.l.b16 %v886
        %v951 = vunpack.c.h.b16 %v886
        %v952 = vunpack.c.l.b16 %v887
        %v953 = vunpack.c.h.b16 %v887
        %v954 = vunpack.c.l.b16 %v888
        %v955 = vunpack.c.h.b16 %v888
        %v956 = vunpack.c.l.b16 %v889
        %v957 = vunpack.c.h.b16 %v889
        %v958 = vunpack.c.l.b16 %v890
        %v959 = vunpack.c.h.b16 %v890
        %v960 = vunpack.c.l.b16 %v891
        %v961 = vunpack.c.h.b16 %v891
        %v962 = vunpack.c.l.b16 %v892
        %v963 = vunpack.c.h.b16 %v892
        %v964 = vunpack.c.l.b16 %v893
        %v965 = vunpack.c.h.b16 %v893
        %v966 = vunpack.c.l.b16 %v894
        %v967 = vunpack.c.h.b16 %v894
        %v968 = vunpack.c.l.b16 %v895
        %v969 = vunpack.c.h.b16 %v895
        %v970 = vunpack.c.l.b16 %v896
        %v971 = vunpack.c.h.b16 %v896
        %v972 = vunpack.c.l.b16 %v897
        %v973 = vunpack.c.h.b16 %v897
        %v974 = vunpack.c.l.b16 %v898
        %v975 = vunpack.c.h.b16 %v898
        %v976 = vunpack.c.l.b16 %v899
        %v977 = vunpack.c.h.b16 %v899
        %v978 = vunpack.c.l.b16 %v900
        %v979 = vunpack.c.h.b16 %v900
        %v980 = vunpack.c.l.b16 %v901
        %v981 = vunpack.c.h.b16 %v901
        %v982 = vunpack.c.l.b16 %v902
        %v983 = vunpack.c.h.b16 %v902
        %v984 = vunpack.c.l.b16 %v903
        %v985 = vunpack.c.h.b16 %v903
        %v986 = vunpack.c.l.b16 %v904
        %v987 = vunpack.c.h.b16 %v904
        %v988 = vunpack.c.l.b16 %v905
        %v989 = vunpack.c.h.b16 %v905
        %v990 = vunpack.c.l.b16 %v906
        %v991 = vunpack.c.h.b16 %v906
        %v992 = vunpack.c.l.b16 %v907
        %v993 = vunpack.c.h.b16 %v907
        %v994 = vunpack.c.l.b16 %v908
        %v995 = vunpack.c.h.b16 %v908
        %v996 = vunpack.c.l.b16 %v909
        %v997 = vunpack.c.h.b16 %v909
        %v998 = vunpack.c.l.b16 %v910
        %v999 = vunpack.c.h.b16 %v910
        %v1000 = vunpack.c.l.b16 %v911
        %v1001 = vunpack.c.h.b16 %v911
        %v1002 = vunpack.c.l.b16 %v912
        %v1003 = vunpack.c.h.b16 %v912
        %v1004 = vunpack.c.l.b16 %v913
        %v1005 = vunpack.c.h.b16 %v913
        %v1006 = vunpack.c.l.b16 %v914
        %v1007 = vunpack.c.h.b16 %v914
        %v1008 = vunpack.c.l.b16 %v915
        %v1009 = vunpack.c.h.b16 %v915
        %v1010 = vunpack.c.l.b16 %v916
        %v1011 = vunpack.c.h.b16 %v916
        %v1012 = vunpack.c.l.b16 %v917
        %v1013 = vunpack.c.h.b16 %v917
        %v1014 = vpack.c.b16 %v950, %v950
        %v1015 = vpack.c.b16 %v951, %v951
        %v1016 = vpack.c.b16 %v952, %v952
        %v1017 = vpack.c.b16 %v953, %v953
        %v1018 = vpack.c.b16 %v954, %v954
        %v1019 = vpack.c.b16 %v955, %v955
        %v1020 = vpack.c.b16 %v956, %v956
        %v1021 = vpack.c.b16 %v957, %v957
        %v1022 = vpack.c.b16 %v958, %v958
        %v1023 = vpack.c.b16 %v959, %v959
        %v1024 = vpack.c.b16 %v960, %v960
        %v1025 = vpack.c.b16 %v961, %v961
        %v1026 = vpack.c.b16 %v962, %v962
        %v1027 = vpack.c.b16 %v963, %v963
        %v1028 = vpack.c.b16 %v964, %v964
        %v1029 = vpack.c.b16 %v965, %v965
        %v1030 = vpack.c.b16 %v966, %v966
        %v1031 = vpack.c.b16 %v967, %v967
        %v1032 = vpack.c.b16 %v968, %v968
        %v1033 = vpack.c.b16 %v969, %v969
        %v1034 = vpack.c.b16 %v970, %v970
        %v1035 = vpack.c.b16 %v971, %v971
        %v1036 = vpack.c.b16 %v972, %v972
        %v1037 = vpack.c.b16 %v973, %v973
        %v1038 = vpack.c.b16 %v974, %v974
        %v1039 = vpack.c.b16 %v975, %v975
        %v1040 = vpack.c.b16 %v976, %v976
        %v1041 = vpack.c.b16 %v977, %v977
        %v1042 = vpack.c.b16 %v978, %v978
        %v1043 = vpack.c.b16 %v979, %v979
        %v1044 = vpack.c.b16 %v980, %v980
        %v1045 = vpack.c.b16 %v981, %v981
        %v1046 = vpack.c.b16 %v982, %v982
        %v1047 = vpack.c.b16 %v983, %v983
        %v1048 = vpack.c.b16 %v984, %v984
        %v1049 = vpack.c.b16 %v985, %v985
        %v1050 = vpack.c.b16 %v986, %v986
        %v1051 = vpack.c.b16 %v987, %v987
        %v1052 = vpack.c.b16 %v988, %v988
        %v1053 = vpack.c.b16 %v989, %v989
        %v1054 = vpack.c.b16 %v990, %v990
        %v1055 = vpack.c.b16 %v991, %v991
        %v1056 = vpack.c.b16 %v992, %v992
        %v1057 = vpack.c.b16 %v993, %v993
        %v1058 = vpack.c.b16 %v994, %v994
        %v1059 = vpack.c.b16 %v995, %v995
        %v1060 = vpack.c.b16 %v996, %v996
        %v1061 = vpack.c.b16 %v997, %v997
        %v1062 = vpack.c.b16 %v998, %v998
        %v1063 = vpack.c.b16 %v999, %v999
        %v1064 = vpack.c.b16 %v1000, %v1000
        %v1065 = vpack.c.b16 %v1001, %v1001
        %v1066 = vpack.c.b16 %v1002, %v1002
        %v1067 = vpack.c.b16 %v1003, %v1003
        %v1068 = vpack.c.b16 %v1004, %v1004
        %v1069 = vpack.c.b16 %v1005, %v1005
        %v1070 = vpack.c.b16 %v1006, %v1006
        %v1071 = vpack.c.b16 %v1007, %v1007
        %v1072 = vpack.c.b16 %v1008, %v1008
        %v1073 = vpack.c.b16 %v1009, %v1009
        %v1074 = vpack.c.b16 %v1010, %v1010
        %v1075 = vpack.c.b16 %v1011, %v1011
        %v1076 = vpack.c.b16 %v1012, %v1012
        %v1077 = vpack.c.b16 %v1013, %v1013
        %1142 = vst [vmem:[%s164] sm:$0xf] %v1014
        %1143 = vst [vmem:[%s164 + $0x4] sm:$0xf] %v1015
        %1144 = vst [vmem:[%s164 + $0x8] sm:$0xf] %v1016
        %1145 = vst [vmem:[%s164 + $0xc] sm:$0xf] %v1017
        %1146 = vst [vmem:[%s164 + $0x10] sm:$0xf] %v1018
        %1147 = vst [vmem:[%s164 + $0x14] sm:$0xf] %v1019
        %1148 = vst [vmem:[%s164 + $0x18] sm:$0xf] %v1020
        %1149 = vst [vmem:[%s164 + $0x1c] sm:$0xf] %v1021
        %1150 = vst [vmem:[%s164 + $0x20] sm:$0xf] %v1022
        %1151 = vst [vmem:[%s164 + $0x24] sm:$0xf] %v1023
        %1152 = vst [vmem:[%s164 + $0x28] sm:$0xf] %v1024
        %1153 = vst [vmem:[%s164 + $0x2c] sm:$0xf] %v1025
        %1154 = vst [vmem:[%s164 + $0x30] sm:$0xf] %v1026
        %1155 = vst [vmem:[%s164 + $0x34] sm:$0xf] %v1027
        %1156 = vst [vmem:[%s164 + $0x38] sm:$0xf] %v1028
        %1157 = vst [vmem:[%s164 + $0x3c] sm:$0xf] %v1029
        %1158 = vst [vmem:[%s164 + $0x40] sm:$0xf] %v1030
        %1159 = vst [vmem:[%s164 + $0x44] sm:$0xf] %v1031
        %1160 = vst [vmem:[%s164 + $0x48] sm:$0xf] %v1032
        %1161 = vst [vmem:[%s164 + $0x4c] sm:$0xf] %v1033
        %1162 = vst [vmem:[%s164 + $0x50] sm:$0xf] %v1034
        %1163 = vst [vmem:[%s164 + $0x54] sm:$0xf] %v1035
        %1164 = vst [vmem:[%s164 + $0x58] sm:$0xf] %v1036
        %1165 = vst [vmem:[%s164 + $0x5c] sm:$0xf] %v1037
        %1166 = vst [vmem:[%s164 + $0x60] sm:$0xf] %v1038
        %1167 = vst [vmem:[%s164 + $0x64] sm:$0xf] %v1039
        %1168 = vst [vmem:[%s164 + $0x68] sm:$0xf] %v1040
        %1169 = vst [vmem:[%s164 + $0x6c] sm:$0xf] %v1041
        %1170 = vst [vmem:[%s164 + $0x70] sm:$0xf] %v1042
        %1171 = vst [vmem:[%s164 + $0x74] sm:$0xf] %v1043
        %1172 = vst [vmem:[%s164 + $0x78] sm:$0xf] %v1044
        %1173 = vst [vmem:[%s164 + $0x7c] sm:$0xf] %v1045
        %1174 = vst [vmem:[%s164 + $0x80] sm:$0xf] %v1046
        %1175 = vst [vmem:[%s164 + $0x84] sm:$0xf] %v1047
        %1176 = vst [vmem:[%s164 + $0x88] sm:$0xf] %v1048
        %1177 = vst [vmem:[%s164 + $0x8c] sm:$0xf] %v1049
        %1178 = vst [vmem:[%s164 + $0x90] sm:$0xf] %v1050
        %1179 = vst [vmem:[%s164 + $0x94] sm:$0xf] %v1051
        %1180 = vst [vmem:[%s164 + $0x98] sm:$0xf] %v1052
        %1181 = vst [vmem:[%s164 + $0x9c] sm:$0xf] %v1053
        %1182 = vst [vmem:[%s164 + $0xa0] sm:$0xf] %v1054
        %1183 = vst [vmem:[%s164 + $0xa4] sm:$0xf] %v1055
        %1184 = vst [vmem:[%s164 + $0xa8] sm:$0xf] %v1056
        %1185 = vst [vmem:[%s164 + $0xac] sm:$0xf] %v1057
        %1186 = vst [vmem:[%s164 + $0xb0] sm:$0xf] %v1058
        %1187 = vst [vmem:[%s164 + $0xb4] sm:$0xf] %v1059
        %1188 = vst [vmem:[%s164 + $0xb8] sm:$0xf] %v1060
        %1189 = vst [vmem:[%s164 + $0xbc] sm:$0xf] %v1061
        %1190 = vst [vmem:[%s164 + $0xc0] sm:$0xf] %v1062
        %1191 = vst [vmem:[%s164 + $0xc4] sm:$0xf] %v1063
        %1192 = vst [vmem:[%s164 + $0xc8] sm:$0xf] %v1064
        %1193 = vst [vmem:[%s164 + $0xcc] sm:$0xf] %v1065
        %1194 = vst [vmem:[%s164 + $0xd0] sm:$0xf] %v1066
        %1195 = vst [vmem:[%s164 + $0xd4] sm:$0xf] %v1067
        %1196 = vst [vmem:[%s164 + $0xd8] sm:$0xf] %v1068
        %1197 = vst [vmem:[%s164 + $0xdc] sm:$0xf] %v1069
        %1198 = vst [vmem:[%s164 + $0xe0] sm:$0xf] %v1070
        %1199 = vst [vmem:[%s164 + $0xe4] sm:$0xf] %v1071
        %1200 = vst [vmem:[%s164 + $0xe8] sm:$0xf] %v1072
        %1201 = vst [vmem:[%s164 + $0xec] sm:$0xf] %v1073
        %1202 = vst [vmem:[%s164 + $0xf0] sm:$0xf] %v1074
        %1203 = vst [vmem:[%s164 + $0xf4] sm:$0xf] %v1075
        %1204 = vst [vmem:[%s164 + $0xf8] sm:$0xf] %v1076
        %1205 = vst [vmem:[%s164 + $0xfc] sm:$0xf] %v1077
        %s1206 = sand.u32 %s93, 1
        %s1207 = scalar_lea.sflag [#allocation3], %s1206
        %s1208 = sand.u32 %s93, 1
        %s1209 = smul.addr %s1208, 256
        %s1210 = scalar_lea.vmem [#allocation2], %s1209
        // Predicated region
        $region33: #{tpu_custom_call.1} parent=31 // pred_check
          %p1211 = pneg %p103
        $region34: #{tpu_custom_call.1} parent=31 // pred_check_branch
          %1213 = sbr.rel (%p1211) target = $region36
        $region35: #{tpu_custom_call.1} parent=31 // pred_region
          %s1214 = smul.u32 64, %s17
          %s1216 = ssub.s32 4096, 4096
          %1217 = vsyncadd %s1207, %s1216
          %s1218 = smul.addr %s1214, 64
          %s1219 = scalar_lea.hbm %s3, %s1218
          %s1220 = sshll.u32 %s1210, 4
          %s1221 = int_to_ptr.vmem [resolvable:$true] %s1220
          %1226 = dma.vmem_to_hbm [thread:$0]  %s1221, 4096, %s1219, %s1207, 64, 64, 4
        $region36: #{tpu_custom_call.1} parent=31 // pred_fallthru
          _
      $region32: #{tpu_custom_call.1} parent=5 // pred_fallthru
        _
      %p1227 = scmp.le.s32.totalorder 2, %s12
      // Predicated region
      $region37: #{tpu_custom_call.1} parent=5 // pred_check
        %p1228 = pneg %p1227
      $region38: #{tpu_custom_call.1} parent=5 // pred_check_branch
        %1230 = sbr.rel (%p1228) target = $region40
      $region39: #{tpu_custom_call.1} parent=5 // pred_region
        %s1231 = ssub.s32 %s12, 2
        // Predicated region
        $region41: #{tpu_custom_call.1} parent=39 // pred_check
          %p1232 = pneg %p109
        $region42: #{tpu_custom_call.1} parent=39 // pred_check_branch
          %1234 = sbr.rel (%p1232) target = $region44
        $region43: #{tpu_custom_call.1} parent=39 // pred_region
          %s1235 = sand.u32 %s94, 1
          %s1236 = scalar_lea.sflag [#allocation3], %s1235
          %s1237 = sand.u32 %s94, 1
          %s1238 = smul.addr %s1237, 256
          %s1239 = scalar_lea.vmem [#allocation2], %s1238
          %1240 = dma.done %s1236, 4096
        $region44: #{tpu_custom_call.1} parent=39 // pred_fallthru
          _
      $region40: #{tpu_custom_call.1} parent=5 // pred_fallthru
        _
    $region6: #{tpu_custom_call.1} parent=1 // loop_footer
      %s16 = sadd.s32 1, %s12
    $region7: #{tpu_custom_call.1} parent=1 // loop_footer_branch
      %11 = sbr.rel target = $region3
    $region8: #{tpu_custom_call.1} parent=1 // loop_exit
      _
    %1241 = vsyncpa [#allocation3], 1
    %s1242 = scalar_lea.sflag [#allocation3], 1
    %1243 = vsyncpa %s1242, 1

</llo_original>
